<compile_context>
chip_gen: v5e
topology: v5e:2x2
jax: 0.10.0
libtpu: 0.0.40
codegen_flags: <defaults>
</compile_context>

<pallas_src>
import functools

import jax
import jax.numpy as jnp
from jax.experimental import pallas as pl
from jax.experimental.pallas import tpu as pltpu


# ----------------------------------------------------------------------------
# Fused kernel: mask * tokens -> {conv_K -> max_t}_K -> concat -> projection
# ----------------------------------------------------------------------------
def _cnn_encoder_kernel(*refs, ngram_sizes, has_mask, has_proj):
    it = iter(refs)
    x_ref = next(it)                                   # [TB, T, E] bf16
    mask_ref = next(it) if has_mask else None          # [TB, T]    bf16
    conv_refs = [(next(it), next(it)) for _ in ngram_sizes]   # ([K*E,F] bf16, [1,F] f32)
    proj_refs = (next(it), next(it)) if has_proj else None    # ([M,D] bf16, [1,D] f32)
    o_ref = next(it)                                   # [TB, D] f32

    x = x_ref[...]
    if has_mask:
        x = x * mask_ref[...][:, :, None]              # fused mask multiply (bf16)
    T = x.shape[1]

    pooled_feats = []
    for K, (w_ref, b_ref) in zip(ngram_sizes, conv_refs):
        P = T - K + 1
        # im2col: lane-concat of K static time shifts -> [TB, P, K*E]; the whole
        # ngram conv becomes a single MXU matmul with a K*E-wide contraction.
        xwin = jnp.concatenate([x[:, j:j + P, :] for j in range(K)], axis=-1)
        acc = jax.lax.dot_general(
            xwin, w_ref[...],
            dimension_numbers=(((2,), (0,)), ((), ())),
            preferred_element_type=jnp.float32)        # [TB, P, F] f32 accumulate
        pooled = jnp.max(acc, axis=1)                  # max over time -> [TB, F]
        # bias + ReLU applied after the max (bias constant over P, ReLU monotone)
        pooled_feats.append(jnp.maximum(pooled + b_ref[...], 0.0))

    mp = (jnp.concatenate(pooled_feats, axis=-1)
          if len(pooled_feats) > 1 else pooled_feats[0])     # [TB, M] f32, stays in VMEM

    if has_proj:
        wp_ref, bp_ref = proj_refs
        out = (jnp.dot(mp.astype(wp_ref.dtype), wp_ref[...],
                       preferred_element_type=jnp.float32) + bp_ref[...])
    else:
        out = mp
    o_ref[...] = out.astype(o_ref.dtype)


# ----------------------------------------------------------------------------
# Wrapper
# ----------------------------------------------------------------------------
def _batch_tile(B):
    """Pick a batch tile: whole batch for tiny B, else the largest 8-multiple tile."""
    if B <= 8 or B % 8 != 0:
        return B
    for tb in (256, 128, 64, 32, 16, 8):
        if B % tb == 0:
            return tb
    return B


def cnn_encoder_forward(tokens, params, mask=None):
    """Pallas CNNEncoder forward.

    tokens: [B, T, E] float32; mask: optional [B, T] float (0/1).
    params: dict with 'convs' -> list of (w [K,E,F], b [1,F]),
            optional 'proj' -> (w [M,D], b [1,D]).
    Returns [B, D] (or [B, M] without projection), float32.
    """
    B, T, E = tokens.shape
    convs = params["convs"]
    ngram_sizes = tuple(int(w.shape[0]) for (w, _) in convs)
    assert T >= max(ngram_sizes), "num_tokens must be >= the largest ngram size"
    proj = params.get("proj")
    has_mask = mask is not None
    has_proj = proj is not None

    TB = _batch_tile(B)
    grid = (B // TB,)

    # bf16 for MXU-facing inputs/weights; f32 accumulation + f32 epilogue.
    inputs = [tokens.astype(jnp.bfloat16)]
    in_specs = [pl.BlockSpec((TB, T, E), lambda i: (i, 0, 0))]
    if has_mask:
        inputs.append(mask.astype(jnp.bfloat16))
        in_specs.append(pl.BlockSpec((TB, T), lambda i: (i, 0)))

    M = 0
    for (w, b) in convs:
        K, Ew, F = w.shape
        assert Ew == E
        w2d = w.reshape(K * E, F).astype(jnp.bfloat16)         # [K*E, F]
        b2d = b.reshape(1, F).astype(jnp.float32)              # [1, F]
        inputs += [w2d, b2d]
        in_specs += [pl.BlockSpec((K * E, F), lambda i: (0, 0)),
                     pl.BlockSpec((1, F), lambda i: (0, 0))]
        M += F

    if has_proj:
        wp, bp = proj
        D = int(wp.shape[1])
        inputs += [wp.astype(jnp.bfloat16), bp.reshape(1, D).astype(jnp.float32)]
        in_specs += [pl.BlockSpec((M, D), lambda i: (0, 0)),
                     pl.BlockSpec((1, D), lambda i: (0, 0))]
    else:
        D = M

    kernel = functools.partial(_cnn_encoder_kernel, ngram_sizes=ngram_sizes,
                               has_mask=has_mask, has_proj=has_proj)
    return pl.pallas_call(
        kernel,
        out_shape=jax.ShapeDtypeStruct((B, D), jnp.float32),
        grid=grid,
        in_specs=in_specs,
        out_specs=pl.BlockSpec((TB, D), lambda i: (i, 0)),
        compiler_params=pltpu.CompilerParams(
            dimension_semantics=("parallel",)),
    )(*inputs)


# ----------------------------------------------------------------------------
# Pure-JAX reference (mirrors the kernel's bf16 casts; correctness check only)
# ----------------------------------------------------------------------------
def cnn_encoder_reference(tokens, params, mask=None):
    x = tokens.astype(jnp.bfloat16)
    if mask is not None:
        x = x * mask.astype(jnp.bfloat16)[..., None]
    x = x.astype(jnp.float32)
    T = x.shape[1]
    outs = []
    for (w, b) in params["convs"]:
        K = w.shape[0]
        P = T - K + 1
        wf = w.astype(jnp.bfloat16).astype(jnp.float32)
        acc = sum(jnp.einsum("bpe,ef->bpf", x[:, j:j + P, :], wf[j])
                  for j in range(K))
        pooled = jnp.max(acc, axis=1)
        outs.append(jnp.maximum(pooled + b.astype(jnp.float32), 0.0))
    mp = jnp.concatenate(outs, axis=1) if len(outs) > 1 else outs[0]
    if params.get("proj") is not None:
        wp, bp = params["proj"]
        mp_bf = mp.astype(jnp.bfloat16).astype(jnp.float32)
        wp_bf = wp.astype(jnp.bfloat16).astype(jnp.float32)
        return mp_bf @ wp_bf + bp.astype(jnp.float32)
    return mp


# ----------------------------------------------------------------------------
# Main
# ----------------------------------------------------------------------------
if __name__ == "__main__":
    B, T = 2, 8                      # batch, num_tokens
    embedding_dim = 32               # E
    num_filters = 16                 # F
    ngram_filter_sizes = (2, 3, 4, 5)
    output_dim = 24                  # projection layer enabled

    key = jax.random.PRNGKey(0)
    keys = jax.random.split(key, 3 + 2 * len(ngram_filter_sizes) + 2)

    tokens = jax.random.normal(keys[0], (B, T, embedding_dim), jnp.float32)
    lengths = jnp.array([T, T - 3], jnp.int32)
    mask = (jnp.arange(T)[None, :] < lengths[:, None]).astype(jnp.float32)

    convs = []
    for i, K in enumerate(ngram_filter_sizes):
        kw = jax.random.normal(
            keys[2 + 2 * i], (K, embedding_dim, num_filters), jnp.float32
        ) * (1.0 / jnp.sqrt(embedding_dim * K))
        kb = jax.random.normal(
            keys[3 + 2 * i], (1, num_filters), jnp.float32) * 0.05
        convs.append((kw, kb))

    maxpool_output_dim = num_filters * len(ngram_filter_sizes)
    wp = jax.random.normal(
        keys[-2], (maxpool_output_dim, output_dim), jnp.float32
    ) * (1.0 / jnp.sqrt(maxpool_output_dim))
    bp = jax.random.normal(keys[-1], (1, output_dim), jnp.float32) * 0.05

    params = {"convs": convs, "proj": (wp, bp)}

    # No-mask path (matches the PyTorch forward's default).
    out = jax.block_until_ready(cnn_encoder_forward(tokens, params, mask=None))
    ref = cnn_encoder_reference(tokens, params, mask=None)
    assert out.shape == (B, output_dim), out.shape
    assert jnp.allclose(out, ref, atol=2e-2, rtol=2e-2), "mismatch vs reference (no mask)"

    # Masked path (mask multiply fused into the kernel).
    out_m = jax.block_until_ready(cnn_encoder_forward(tokens, params, mask=mask))
    ref_m = cnn_encoder_reference(tokens, params, mask=mask)
    assert jnp.allclose(out_m, ref_m, atol=2e-2, rtol=2e-2), "mismatch vs reference (mask)"

    print("KERNEL_OK")
</pallas_src>

<mosaic_0001>
module attributes {stable_mosaic.version = 11 : i64} {
  func.func @_cnn_encoder_kernel(%arg0: i32, %arg1: memref<2x8x32xbf16, #tpu.memory_space<vmem>>, %arg2: memref<64x16xbf16, #tpu.memory_space<vmem>>, %arg3: memref<1x16xf32, #tpu.memory_space<vmem>>, %arg4: memref<96x16xbf16, #tpu.memory_space<vmem>>, %arg5: memref<1x16xf32, #tpu.memory_space<vmem>>, %arg6: memref<128x16xbf16, #tpu.memory_space<vmem>>, %arg7: memref<1x16xf32, #tpu.memory_space<vmem>>, %arg8: memref<160x16xbf16, #tpu.memory_space<vmem>>, %arg9: memref<1x16xf32, #tpu.memory_space<vmem>>, %arg10: memref<64x24xbf16, #tpu.memory_space<vmem>>, %arg11: memref<1x24xf32, #tpu.memory_space<vmem>>, %arg12: memref<2x24xf32, #tpu.memory_space<vmem>>) attributes {dimension_semantics = [#tpu.dimension_semantics<parallel>], iteration_bounds = array<i64: 1>, scalar_prefetch = 0 : i64, scratch_operands = 0 : i64, tpu.core_type = #tpu.core_type<tc>, window_params = [{transform_indices = @transform_0, window_bounds = array<i64: 2, 8, 32>}, {pipeline_mode = #tpu.pipeline_mode<synchronous>, transform_indices = @transform_1, window_bounds = array<i64: 64, 16>}, {pipeline_mode = #tpu.pipeline_mode<synchronous>, transform_indices = @transform_2, window_bounds = array<i64: 1, 16>}, {pipeline_mode = #tpu.pipeline_mode<synchronous>, transform_indices = @transform_3, window_bounds = array<i64: 96, 16>}, {pipeline_mode = #tpu.pipeline_mode<synchronous>, transform_indices = @transform_4, window_bounds = array<i64: 1, 16>}, {pipeline_mode = #tpu.pipeline_mode<synchronous>, transform_indices = @transform_5, window_bounds = array<i64: 128, 16>}, {pipeline_mode = #tpu.pipeline_mode<synchronous>, transform_indices = @transform_6, window_bounds = array<i64: 1, 16>}, {pipeline_mode = #tpu.pipeline_mode<synchronous>, transform_indices = @transform_7, window_bounds = array<i64: 160, 16>}, {pipeline_mode = #tpu.pipeline_mode<synchronous>, transform_indices = @transform_8, window_bounds = array<i64: 1, 16>}, {pipeline_mode = #tpu.pipeline_mode<synchronous>, transform_indices = @transform_9, window_bounds = array<i64: 64, 24>}, {pipeline_mode = #tpu.pipeline_mode<synchronous>, transform_indices = @transform_10, window_bounds = array<i64: 1, 24>}, {transform_indices = @transform_11, window_bounds = array<i64: 2, 24>}]} {
    %c0 = arith.constant 0 : index
    %c0_0 = arith.constant 0 : index
    %c0_1 = arith.constant 0 : index
    %0 = vector.load %arg1[%c0, %c0_0, %c0_1] : memref<2x8x32xbf16, #tpu.memory_space<vmem>>, vector<2x8x32xbf16>
    %1 = vector.extract_strided_slice %0 {offsets = [0, 0, 0], sizes = [2, 7, 32], strides = [1, 1, 1]} : vector<2x8x32xbf16> to vector<2x7x32xbf16>
    %2 = vector.extract_strided_slice %0 {offsets = [0, 1, 0], sizes = [2, 7, 32], strides = [1, 1, 1]} : vector<2x8x32xbf16> to vector<2x7x32xbf16>
    %3 = tpu.concatenate %1, %2 in 2 : vector<2x7x32xbf16>, vector<2x7x32xbf16> -> vector<2x7x64xbf16>
    %c0_2 = arith.constant 0 : index
    %c0_3 = arith.constant 0 : index
    %4 = vector.load %arg2[%c0_2, %c0_3] : memref<64x16xbf16, #tpu.memory_space<vmem>>, vector<64x16xbf16>
    %cst = arith.constant dense<0.000000e+00> : vector<2x7x16xf32>
    %5 = tpu.matmul %3, %4, %cst {dimension_numbers = #tpu.dot_dimension_numbers<[2], [0], [0, 1], [1], [0, 0, 0, 1, 1, 1], [], []>} : vector<2x7x64xbf16>, vector<64x16xbf16>, vector<2x7x16xf32> -> vector<2x7x16xf32>
    %cst_4 = arith.constant dense<0xFF800000> : vector<2x16xf32>
    %6 = vector.multi_reduction <maximumf>, %5, %cst_4 [1] : vector<2x7x16xf32> to vector<2x16xf32>
    %c0_5 = arith.constant 0 : index
    %c0_6 = arith.constant 0 : index
    %7 = vector.load %arg3[%c0_5, %c0_6] : memref<1x16xf32, #tpu.memory_space<vmem>>, vector<1x16xf32>
    %8 = vector.broadcast %7 : vector<1x16xf32> to vector<2x16xf32>
    %9 = arith.addf %6, %8 : vector<2x16xf32>
    %cst_7 = arith.constant 0.000000e+00 : f32
    %10 = vector.broadcast %cst_7 : f32 to vector<2x16xf32>
    %11 = arith.maximumf %9, %10 : vector<2x16xf32>
    %12 = vector.extract_strided_slice %0 {offsets = [0, 0, 0], sizes = [2, 6, 32], strides = [1, 1, 1]} : vector<2x8x32xbf16> to vector<2x6x32xbf16>
    %13 = vector.extract_strided_slice %0 {offsets = [0, 1, 0], sizes = [2, 6, 32], strides = [1, 1, 1]} : vector<2x8x32xbf16> to vector<2x6x32xbf16>
    %14 = vector.extract_strided_slice %0 {offsets = [0, 2, 0], sizes = [2, 6, 32], strides = [1, 1, 1]} : vector<2x8x32xbf16> to vector<2x6x32xbf16>
    %15 = tpu.concatenate %12, %13, %14 in 2 : vector<2x6x32xbf16>, vector<2x6x32xbf16>, vector<2x6x32xbf16> -> vector<2x6x96xbf16>
    %c0_8 = arith.constant 0 : index
    %c0_9 = arith.constant 0 : index
    %16 = vector.load %arg4[%c0_8, %c0_9] : memref<96x16xbf16, #tpu.memory_space<vmem>>, vector<96x16xbf16>
    %cst_10 = arith.constant dense<0.000000e+00> : vector<2x6x16xf32>
    %17 = tpu.matmul %15, %16, %cst_10 {dimension_numbers = #tpu.dot_dimension_numbers<[2], [0], [0, 1], [1], [0, 0, 0, 1, 1, 1], [], []>} : vector<2x6x96xbf16>, vector<96x16xbf16>, vector<2x6x16xf32> -> vector<2x6x16xf32>
    %cst_11 = arith.constant dense<0xFF800000> : vector<2x16xf32>
    %18 = vector.multi_reduction <maximumf>, %17, %cst_11 [1] : vector<2x6x16xf32> to vector<2x16xf32>
    %c0_12 = arith.constant 0 : index
    %c0_13 = arith.constant 0 : index
    %19 = vector.load %arg5[%c0_12, %c0_13] : memref<1x16xf32, #tpu.memory_space<vmem>>, vector<1x16xf32>
    %20 = vector.broadcast %19 : vector<1x16xf32> to vector<2x16xf32>
    %21 = arith.addf %18, %20 : vector<2x16xf32>
    %cst_14 = arith.constant 0.000000e+00 : f32
    %22 = vector.broadcast %cst_14 : f32 to vector<2x16xf32>
    %23 = arith.maximumf %21, %22 : vector<2x16xf32>
    %24 = vector.extract_strided_slice %0 {offsets = [0, 0, 0], sizes = [2, 5, 32], strides = [1, 1, 1]} : vector<2x8x32xbf16> to vector<2x5x32xbf16>
    %25 = vector.extract_strided_slice %0 {offsets = [0, 1, 0], sizes = [2, 5, 32], strides = [1, 1, 1]} : vector<2x8x32xbf16> to vector<2x5x32xbf16>
    %26 = vector.extract_strided_slice %0 {offsets = [0, 2, 0], sizes = [2, 5, 32], strides = [1, 1, 1]} : vector<2x8x32xbf16> to vector<2x5x32xbf16>
    %27 = vector.extract_strided_slice %0 {offsets = [0, 3, 0], sizes = [2, 5, 32], strides = [1, 1, 1]} : vector<2x8x32xbf16> to vector<2x5x32xbf16>
    %28 = tpu.concatenate %24, %25, %26, %27 in 2 : vector<2x5x32xbf16>, vector<2x5x32xbf16>, vector<2x5x32xbf16>, vector<2x5x32xbf16> -> vector<2x5x128xbf16>
    %c0_15 = arith.constant 0 : index
    %c0_16 = arith.constant 0 : index
    %29 = vector.load %arg6[%c0_15, %c0_16] : memref<128x16xbf16, #tpu.memory_space<vmem>>, vector<128x16xbf16>
    %cst_17 = arith.constant dense<0.000000e+00> : vector<2x5x16xf32>
    %30 = tpu.matmul %28, %29, %cst_17 {dimension_numbers = #tpu.dot_dimension_numbers<[2], [0], [0, 1], [1], [0, 0, 0, 1, 1, 1], [], []>} : vector<2x5x128xbf16>, vector<128x16xbf16>, vector<2x5x16xf32> -> vector<2x5x16xf32>
    %cst_18 = arith.constant dense<0xFF800000> : vector<2x16xf32>
    %31 = vector.multi_reduction <maximumf>, %30, %cst_18 [1] : vector<2x5x16xf32> to vector<2x16xf32>
    %c0_19 = arith.constant 0 : index
    %c0_20 = arith.constant 0 : index
    %32 = vector.load %arg7[%c0_19, %c0_20] : memref<1x16xf32, #tpu.memory_space<vmem>>, vector<1x16xf32>
    %33 = vector.broadcast %32 : vector<1x16xf32> to vector<2x16xf32>
    %34 = arith.addf %31, %33 : vector<2x16xf32>
    %cst_21 = arith.constant 0.000000e+00 : f32
    %35 = vector.broadcast %cst_21 : f32 to vector<2x16xf32>
    %36 = arith.maximumf %34, %35 : vector<2x16xf32>
    %37 = vector.extract_strided_slice %0 {offsets = [0, 0, 0], sizes = [2, 4, 32], strides = [1, 1, 1]} : vector<2x8x32xbf16> to vector<2x4x32xbf16>
    %38 = vector.extract_strided_slice %0 {offsets = [0, 1, 0], sizes = [2, 4, 32], strides = [1, 1, 1]} : vector<2x8x32xbf16> to vector<2x4x32xbf16>
    %39 = vector.extract_strided_slice %0 {offsets = [0, 2, 0], sizes = [2, 4, 32], strides = [1, 1, 1]} : vector<2x8x32xbf16> to vector<2x4x32xbf16>
    %40 = vector.extract_strided_slice %0 {offsets = [0, 3, 0], sizes = [2, 4, 32], strides = [1, 1, 1]} : vector<2x8x32xbf16> to vector<2x4x32xbf16>
    %41 = vector.extract_strided_slice %0 {offsets = [0, 4, 0], sizes = [2, 4, 32], strides = [1, 1, 1]} : vector<2x8x32xbf16> to vector<2x4x32xbf16>
    %42 = tpu.concatenate %37, %38, %39, %40, %41 in 2 : vector<2x4x32xbf16>, vector<2x4x32xbf16>, vector<2x4x32xbf16>, vector<2x4x32xbf16>, vector<2x4x32xbf16> -> vector<2x4x160xbf16>
    %c0_22 = arith.constant 0 : index
    %c0_23 = arith.constant 0 : index
    %43 = vector.load %arg8[%c0_22, %c0_23] : memref<160x16xbf16, #tpu.memory_space<vmem>>, vector<160x16xbf16>
    %cst_24 = arith.constant dense<0.000000e+00> : vector<2x4x16xf32>
    %44 = tpu.matmul %42, %43, %cst_24 {dimension_numbers = #tpu.dot_dimension_numbers<[2], [0], [0, 1], [1], [0, 0, 0, 1, 1, 1], [], []>} : vector<2x4x160xbf16>, vector<160x16xbf16>, vector<2x4x16xf32> -> vector<2x4x16xf32>
    %cst_25 = arith.constant dense<0xFF800000> : vector<2x16xf32>
    %45 = vector.multi_reduction <maximumf>, %44, %cst_25 [1] : vector<2x4x16xf32> to vector<2x16xf32>
    %c0_26 = arith.constant 0 : index
    %c0_27 = arith.constant 0 : index
    %46 = vector.load %arg9[%c0_26, %c0_27] : memref<1x16xf32, #tpu.memory_space<vmem>>, vector<1x16xf32>
    %47 = vector.broadcast %46 : vector<1x16xf32> to vector<2x16xf32>
    %48 = arith.addf %45, %47 : vector<2x16xf32>
    %cst_28 = arith.constant 0.000000e+00 : f32
    %49 = vector.broadcast %cst_28 : f32 to vector<2x16xf32>
    %50 = arith.maximumf %48, %49 : vector<2x16xf32>
    %51 = tpu.concatenate %11, %23, %36, %50 in 1 : vector<2x16xf32>, vector<2x16xf32>, vector<2x16xf32>, vector<2x16xf32> -> vector<2x64xf32>
    %52 = arith.truncf %51 : vector<2x64xf32> to vector<2x64xbf16>
    %c0_29 = arith.constant 0 : index
    %c0_30 = arith.constant 0 : index
    %53 = vector.load %arg10[%c0_29, %c0_30] : memref<64x24xbf16, #tpu.memory_space<vmem>>, vector<64x24xbf16>
    %cst_31 = arith.constant dense<0.000000e+00> : vector<2x24xf32>
    %54 = tpu.matmul %52, %53, %cst_31 {dimension_numbers = #tpu.dot_dimension_numbers<[1], [0], [0], [1], [0, 0, 1, 1], [], []>} : vector<2x64xbf16>, vector<64x24xbf16>, vector<2x24xf32> -> vector<2x24xf32>
    %c0_32 = arith.constant 0 : index
    %c0_33 = arith.constant 0 : index
    %55 = vector.load %arg11[%c0_32, %c0_33] : memref<1x24xf32, #tpu.memory_space<vmem>>, vector<1x24xf32>
    %56 = vector.broadcast %55 : vector<1x24xf32> to vector<2x24xf32>
    %57 = arith.addf %54, %56 : vector<2x24xf32>
    %c0_34 = arith.constant 0 : index
    %c0_35 = arith.constant 0 : index
    %58 = vector.load %arg12[%c0_34, %c0_35] : memref<2x24xf32, #tpu.memory_space<vmem>>, vector<2x24xf32>
    tpu.vector_store %arg12[%c0_34, %c0_35], %57 {strides = array<i32>} : memref<2x24xf32, #tpu.memory_space<vmem>>, vector<2x24xf32>,
    return
  }
  func.func @transform_0(%arg0: i32) -> (i32, i32, i32) {
    %c0_i32 = arith.constant 0 : i32
    %c0_i32_0 = arith.constant 0 : i32
    %c0_i32_1 = arith.constant 0 : i32
    return %arg0, %c0_i32, %c0_i32_0 : i32, i32, i32
  }
  func.func @transform_1(%arg0: i32) -> (i32, i32) {
    %c0_i32 = arith.constant 0 : i32
    %c0_i32_0 = arith.constant 0 : i32
    %c0_i32_1 = arith.constant 0 : i32
    return %c0_i32, %c0_i32_0 : i32, i32
  }
  func.func @transform_2(%arg0: i32) -> (i32, i32) {
    %c0_i32 = arith.constant 0 : i32
    %c0_i32_0 = arith.constant 0 : i32
    %c0_i32_1 = arith.constant 0 : i32
    return %c0_i32, %c0_i32_0 : i32, i32
  }
  func.func @transform_3(%arg0: i32) -> (i32, i32) {
    %c0_i32 = arith.constant 0 : i32
    %c0_i32_0 = arith.constant 0 : i32
    %c0_i32_1 = arith.constant 0 : i32
    return %c0_i32, %c0_i32_0 : i32, i32
  }
  func.func @transform_4(%arg0: i32) -> (i32, i32) {
    %c0_i32 = arith.constant 0 : i32
    %c0_i32_0 = arith.constant 0 : i32
    %c0_i32_1 = arith.constant 0 : i32
    return %c0_i32, %c0_i32_0 : i32, i32
  }
  func.func @transform_5(%arg0: i32) -> (i32, i32) {
    %c0_i32 = arith.constant 0 : i32
    %c0_i32_0 = arith.constant 0 : i32
    %c0_i32_1 = arith.constant 0 : i32
    return %c0_i32, %c0_i32_0 : i32, i32
  }
  func.func @transform_6(%arg0: i32) -> (i32, i32) {
    %c0_i32 = arith.constant 0 : i32
    %c0_i32_0 = arith.constant 0 : i32
    %c0_i32_1 = arith.constant 0 : i32
    return %c0_i32, %c0_i32_0 : i32, i32
  }
  func.func @transform_7(%arg0: i32) -> (i32, i32) {
    %c0_i32 = arith.constant 0 : i32
    %c0_i32_0 = arith.constant 0 : i32
    %c0_i32_1 = arith.constant 0 : i32
    return %c0_i32, %c0_i32_0 : i32, i32
  }
  func.func @transform_8(%arg0: i32) -> (i32, i32) {
    %c0_i32 = arith.constant 0 : i32
    %c0_i32_0 = arith.constant 0 : i32
    %c0_i32_1 = arith.constant 0 : i32
    return %c0_i32, %c0_i32_0 : i32, i32
  }
  func.func @transform_9(%arg0: i32) -> (i32, i32) {
    %c0_i32 = arith.constant 0 : i32
    %c0_i32_0 = arith.constant 0 : i32
    %c0_i32_1 = arith.constant 0 : i32
    return %c0_i32, %c0_i32_0 : i32, i32
  }
  func.func @transform_10(%arg0: i32) -> (i32, i32) {
    %c0_i32 = arith.constant 0 : i32
    %c0_i32_0 = arith.constant 0 : i32
    %c0_i32_1 = arith.constant 0 : i32
    return %c0_i32, %c0_i32_0 : i32, i32
  }
  func.func @transform_11(%arg0: i32) -> (i32, i32) {
    %c0_i32 = arith.constant 0 : i32
    %c0_i32_0 = arith.constant 0 : i32
    return %arg0, %c0_i32 : i32, i32
  }
}

</mosaic_0001>

<llo_original>
// kernel: tpu_custom_call.1
$region0: #{tpu_custom_call.1}
  #allocation0 [shape = 'u32[]', space=smem, size = 0x4, offset = 0x4, fixed_abs, tag = 'smem constant byte address 0x4 - core index']
  #allocation1 [shape = 'u32[72,128]{1,0:T(1,128)}', space=vmem, size = 0x9000, scoped, tag = 'internal scratch']
  %s0 = inlined_call_operand.vmem [shape: bf16[2,8,32], index: 0, kind: input, shape index: {}]
  %s1 = inlined_call_operand.vmem [shape: bf16[64,16], index: 1, kind: input, shape index: {}]
  %s2 = inlined_call_operand.vmem [shape: f32[1,16], index: 2, kind: input, shape index: {}]
  %s3 = inlined_call_operand.vmem [shape: bf16[96,16], index: 3, kind: input, shape index: {}]
  %s4 = inlined_call_operand.vmem [shape: f32[1,16], index: 4, kind: input, shape index: {}]
  %s5 = inlined_call_operand.vmem [shape: bf16[128,16], index: 5, kind: input, shape index: {}]
  %s6 = inlined_call_operand.vmem [shape: f32[1,16], index: 6, kind: input, shape index: {}]
  %s7 = inlined_call_operand.vmem [shape: bf16[160,16], index: 7, kind: input, shape index: {}]
  %s8 = inlined_call_operand.vmem [shape: f32[1,16], index: 8, kind: input, shape index: {}]
  %s9 = inlined_call_operand.vmem [shape: bf16[64,24], index: 9, kind: input, shape index: {}]
  %s10 = inlined_call_operand.vmem [shape: f32[1,24], index: 10, kind: input, shape index: {}]
  %s11 = inlined_call_operand.hbm [shape: f32[2,24], index: 11, kind: output, shape index: {}]
  %s12 = sld [smem:[#allocation0]]
  $region54: #{tpu_custom_call.1} parent=0
    _
  %s14 = ssub.s32 1, %s12
  %s15 = scalar_select 0, %s14, %s12
  $region1: #{tpu_custom_call.1} parent=0
    #allocation2 [shape = 'u8[1024]{0}', space=vmem, size = 0x400, scoped, tag = 'output window, operand 0, single buffered']
    #allocation3 [shape = 's32[1]{0}', space=sflag, size = 0x4, scoped, tag = 'scoped memory for tpu_custom_call.1']
    %16 = vsyncpa [#allocation3], 0
    // Predicated region
    $region2: #{tpu_custom_call.1} parent=1 // pred_check
      _
    $region3: #{tpu_custom_call.1} parent=1 // pred_check_branch
      %18 = sbr.rel (0) target = $region5
    $region4: #{tpu_custom_call.1} parent=1 // pred_region
      _
    $region5: #{tpu_custom_call.1} parent=1 // pred_fallthru
      _
    // Predicated region
    $region6: #{tpu_custom_call.1} parent=1 // pred_check
      _
    $region7: #{tpu_custom_call.1} parent=1 // pred_check_branch
      %20 = sbr.rel (0) target = $region9
    $region8: #{tpu_custom_call.1} parent=1 // pred_region
      _
    $region9: #{tpu_custom_call.1} parent=1 // pred_fallthru
      _
    // Predicated region
    $region10: #{tpu_custom_call.1} parent=1 // pred_check
      _
    $region11: #{tpu_custom_call.1} parent=1 // pred_check_branch
      %22 = sbr.rel (0) target = $region13
    $region12: #{tpu_custom_call.1} parent=1 // pred_region
      _
    $region13: #{tpu_custom_call.1} parent=1 // pred_fallthru
      _
    // Predicated region
    $region14: #{tpu_custom_call.1} parent=1 // pred_check
      _
    $region15: #{tpu_custom_call.1} parent=1 // pred_check_branch
      %24 = sbr.rel (0) target = $region17
    $region16: #{tpu_custom_call.1} parent=1 // pred_region
      _
    $region17: #{tpu_custom_call.1} parent=1 // pred_fallthru
      _
    // Predicated region
    $region18: #{tpu_custom_call.1} parent=1 // pred_check
      _
    $region19: #{tpu_custom_call.1} parent=1 // pred_check_branch
      %26 = sbr.rel (0) target = $region21
    $region20: #{tpu_custom_call.1} parent=1 // pred_region
      _
    $region21: #{tpu_custom_call.1} parent=1 // pred_fallthru
      _
    // Predicated region
    $region22: #{tpu_custom_call.1} parent=1 // pred_check
      _
    $region23: #{tpu_custom_call.1} parent=1 // pred_check_branch
      %28 = sbr.rel (0) target = $region25
    $region24: #{tpu_custom_call.1} parent=1 // pred_region
      _
    $region25: #{tpu_custom_call.1} parent=1 // pred_fallthru
      _
    // Predicated region
    $region26: #{tpu_custom_call.1} parent=1 // pred_check
      _
    $region27: #{tpu_custom_call.1} parent=1 // pred_check_branch
      %30 = sbr.rel (0) target = $region29
    $region28: #{tpu_custom_call.1} parent=1 // pred_region
      _
    $region29: #{tpu_custom_call.1} parent=1 // pred_fallthru
      _
    // Predicated region
    $region30: #{tpu_custom_call.1} parent=1 // pred_check
      _
    $region31: #{tpu_custom_call.1} parent=1 // pred_check_branch
      %32 = sbr.rel (0) target = $region33
    $region32: #{tpu_custom_call.1} parent=1 // pred_region
      _
    $region33: #{tpu_custom_call.1} parent=1 // pred_fallthru
      _
    // Predicated region
    $region34: #{tpu_custom_call.1} parent=1 // pred_check
      _
    $region35: #{tpu_custom_call.1} parent=1 // pred_check_branch
      %34 = sbr.rel (0) target = $region37
    $region36: #{tpu_custom_call.1} parent=1 // pred_region
      _
    $region37: #{tpu_custom_call.1} parent=1 // pred_fallthru
      _
    // Predicated region
    $region38: #{tpu_custom_call.1} parent=1 // pred_check
      _
    $region39: #{tpu_custom_call.1} parent=1 // pred_check_branch
      %36 = sbr.rel (0) target = $region41
    $region40: #{tpu_custom_call.1} parent=1 // pred_region
      _
    $region41: #{tpu_custom_call.1} parent=1 // pred_fallthru
      _
    // Predicated region
    $region42: #{tpu_custom_call.1} parent=1 // pred_check
      _
    $region43: #{tpu_custom_call.1} parent=1 // pred_check_branch
      %38 = sbr.rel (0) target = $region45
    $region44: #{tpu_custom_call.1} parent=1 // pred_region
      _
    $region45: #{tpu_custom_call.1} parent=1 // pred_fallthru
      _
    %v40 = vld [vmem:[%s0] sm:$0xf]
    %v41 = vld [vmem:[%s0 + $0x4] sm:$0xf]
    %v44 = vunpack.c.l.b16 %v40
    %v45 = vunpack.c.l.b16 %v41
    %v46 = vpack.c.b16 %v44, %v44
    %v47 = vpack.c.b16 %v45, %v45
    %v49 = vshrl.u32 %v46, 16
    %v51 = vshll.u32 %v46, 16
    %v53 = vrot.slane %v51, 1
    %v54 = vor.u32 %v49, %v53
    %v56 = vshrl.u32 %v47, 16
    %v58 = vshll.u32 %v47, 16
    %v60 = vrot.slane %v58, 1
    %v61 = vor.u32 %v56, %v60
    %62 = vrot.lane.b32.xlu0 %v54, 32
    %v63 = vpop.permute.xlu0 %62
    %64 = vrot.lane.b32.xlu0 %v61, 32
    %v65 = vpop.permute.xlu0 %64
    %vm66 = vcmask 261120
    %v69 = vsel %vm66, %v40, %v63
    %v72 = vsel %vm66, %v41, %v65
    %v73 = vld [vmem:[%s1] sm:$0xf]
    %v74 = vld [vmem:[%s1 + $0x4] sm:$0xf]
    %v75 = vld [vmem:[%s1 + $0x8] sm:$0xf]
    %v76 = vld [vmem:[%s1 + $0xc] sm:$0xf]
    %v77 = vld [vmem:[%s1 + $0x10] sm:$0xf]
    %v78 = vld [vmem:[%s1 + $0x14] sm:$0xf]
    %v79 = vld [vmem:[%s1 + $0x18] sm:$0xf]
    %v80 = vld [vmem:[%s1 + $0x1c] sm:$0xf]
    %v83 = vrot.slane %v69, 1
    %v84 = vrot.slane %v69, 2
    %v85 = vrot.slane %v69, 3
    %v86 = vrot.slane %v72, 1
    %v87 = vrot.slane %v72, 2
    %v88 = vrot.slane %v72, 3
    %v89 = vunpack.i.l.s16 %v69
    %v90 = vunpack.i.h.s16 %v69
    %v91 = vunpack.i.l.s16 %v83
    %v92 = vunpack.i.h.s16 %v83
    %v93 = vunpack.i.l.s16 %v84
    %v94 = vunpack.i.h.s16 %v84
    %v95 = vunpack.i.l.s16 %v85
    %v96 = vunpack.i.l.s16 %v72
    %v97 = vunpack.i.h.s16 %v72
    %v98 = vunpack.i.l.s16 %v86
    %v99 = vunpack.i.h.s16 %v86
    %v100 = vunpack.i.l.s16 %v87
    %v101 = vunpack.i.h.s16 %v87
    %v102 = vunpack.i.l.s16 %v88
    %v103 = vpack.i.b16 %v90, %v89
    %v104 = vpack.i.b16 %v92, %v91
    %v105 = vpack.i.b16 %v94, %v93
    %v106 = vpack.i.b16 %v96, %v95
    %v107 = vpack.i.b16 %v98, %v97
    %v108 = vpack.i.b16 %v100, %v99
    %v109 = vpack.i.b16 %v102, %v101
    %111 = vst [vmem:[#allocation1] ss:$9 sm:$0xff] %v103
    %s113 = scalar_lea.vmem [#allocation1], 1
    %114 = vst [vmem:[%s113] ss:$9 sm:$0xff] %v104
    %s116 = scalar_lea.vmem [#allocation1], 2
    %117 = vst [vmem:[%s116] ss:$9 sm:$0xff] %v105
    %s119 = scalar_lea.vmem [#allocation1], 3
    %120 = vst [vmem:[%s119] ss:$9 sm:$0xff] %v106
    %s122 = scalar_lea.vmem [#allocation1], 4
    %123 = vst [vmem:[%s122] ss:$9 sm:$0xff] %v107
    %s125 = scalar_lea.vmem [#allocation1], 5
    %126 = vst [vmem:[%s125] ss:$9 sm:$0xff] %v108
    %s128 = scalar_lea.vmem [#allocation1], 6
    %129 = vst [vmem:[%s128] ss:$9 sm:$0xff] %v109
    %v130 = vld [vmem:[#allocation1] sm:$0xff]
    %v139 = vunpack.c.l.b16 %v73
    %v140 = vunpack.c.l.b16 %v74
    %v141 = vunpack.c.l.b16 %v75
    %v142 = vunpack.c.l.b16 %v76
    %v143 = vunpack.c.l.b16 %v77
    %v144 = vunpack.c.l.b16 %v78
    %v145 = vunpack.c.l.b16 %v79
    %v146 = vunpack.c.l.b16 %v80
    %v147 = vpack.c.b16 %v140, %v139
    %v148 = vpack.c.b16 %v142, %v141
    %v149 = vpack.c.b16 %v144, %v143
    %v150 = vpack.c.b16 %v146, %v145
    %vm155 = vcmask 523264
    %v156 = vsel %vm155, %v130, 0
    %158 = vmatpush.bf16.msra.mxu0 0
    %159 = vmatpush.bf16.msra.mxu0 0
    %160 = vmatpush.bf16.msra.mxu0 0
    %161 = vmatpush.bf16.msra.mxu0 0
    %162 = vmatpush.bf16.msra.mxu0 %v150
    %163 = vmatpush.bf16.msra.mxu0 %v149
    %164 = vmatpush.bf16.msra.mxu0 %v148
    %165 = vmatpush.bf16.msra.mxu0 %v147
    %166 = vmatmul.bf16.gmra.mxu0 %v156
    %v167 = vpop.f32.mrf.mxu0
    %v168 = vadd.f32 0.0, %v167
    %v169 = vpop.f32.mrf.mxu0
    %v170 = vadd.f32 0.0, %v169
    %171 = vdwg.mxu0
    %v174 = vrot.slane %v168, 1
    %v175 = vrot.slane %v168, 2
    %v176 = vrot.slane %v168, 3
    %v177 = vrot.slane %v168, 4
    %v178 = vrot.slane %v168, 5
    %v179 = vrot.slane %v168, 6
    %v180 = vrot.slane %v168, 7
    %v181 = vrot.slane %v170, 1
    %v182 = vrot.slane %v170, 2
    %v183 = vrot.slane %v170, 3
    %v184 = vrot.slane %v170, 4
    %v185 = vrot.slane %v170, 5
    %186 = vst [vmem:[#allocation1] ss:$9 sm:$0xff] %v168
    %s187 = scalar_lea.vmem [#allocation1], 1
    %188 = vst [vmem:[%s187] ss:$9 sm:$0xff] %v174
    %s189 = scalar_lea.vmem [#allocation1], 2
    %190 = vst [vmem:[%s189] ss:$9 sm:$0xff] %v175
    %s191 = scalar_lea.vmem [#allocation1], 3
    %192 = vst [vmem:[%s191] ss:$9 sm:$0xff] %v176
    %s193 = scalar_lea.vmem [#allocation1], 4
    %194 = vst [vmem:[%s193] ss:$9 sm:$0xff] %v177
    %s195 = scalar_lea.vmem [#allocation1], 5
    %196 = vst [vmem:[%s195] ss:$9 sm:$0xff] %v178
    %s197 = scalar_lea.vmem [#allocation1], 6
    %198 = vst [vmem:[%s197] ss:$9 sm:$0xff] %v179
    %v199 = vld [vmem:[#allocation1] sm:$0xff]
    %200 = vst [vmem:[#allocation1] ss:$9 sm:$0xff] %v180
    %201 = vst [vmem:[%s187] ss:$9 sm:$0xff] %v170
    %202 = vst [vmem:[%s189] ss:$9 sm:$0xff] %v181
    %203 = vst [vmem:[%s191] ss:$9 sm:$0xff] %v182
    %204 = vst [vmem:[%s193] ss:$9 sm:$0xff] %v183
    %205 = vst [vmem:[%s195] ss:$9 sm:$0xff] %v184
    %206 = vst [vmem:[%s197] ss:$9 sm:$0xff] %v185
    %v207 = vld [vmem:[#allocation1] sm:$0xff]
    %vm210 = vcmask 129024
    %v211 = vsel %vm210, %v199, -inf
    %v212 = vrot.slane %v211, 4
    %v213 = vmax.f32 %v211, %v212
    %v214 = vrot.slane %v213, 2
    %v215 = vmax.f32 %v213, %v214
    %v216 = vrot.slane %v215, 1
    %v217 = vmax.f32 %v215, %v216
    %v218 = vsel %vm210, %v207, -inf
    %v219 = vrot.slane %v218, 4
    %v220 = vmax.f32 %v218, %v219
    %v221 = vrot.slane %v220, 2
    %v222 = vmax.f32 %v220, %v221
    %v223 = vrot.slane %v222, 1
    %v224 = vmax.f32 %v222, %v223
    %v225 = vld [vmem:[%s2] sm:$0x1]
    %v227 = vperm.slane %v225, 0
    %v229 = vadd.f32 %v217, %v227
    %v230 = vadd.f32 %v224, %v227
    %v231 = vmax.f32 %v229, 0.0
    %v232 = vmax.f32 %v230, 0.0
    %v233 = vrot.slane %v46, 1
    %v234 = vrot.slane %v47, 1
    %235 = vrot.lane.b32.xlu0 %v233, 64
    %v236 = vpop.permute.xlu0 %235
    %237 = vrot.lane.b32.xlu0 %v234, 64
    %v238 = vpop.permute.xlu0 %237
    %v240 = vsel %vm155, %v69, %v236
    %v242 = vsel %vm155, %v72, %v238
    %v243 = vld [vmem:[%s3] sm:$0xf]
    %v244 = vld [vmem:[%s3 + $0x4] sm:$0xf]
    %v245 = vld [vmem:[%s3 + $0x8] sm:$0xf]
    %v246 = vld [vmem:[%s3 + $0xc] sm:$0xf]
    %v247 = vld [vmem:[%s3 + $0x10] sm:$0xf]
    %v248 = vld [vmem:[%s3 + $0x14] sm:$0xf]
    %v249 = vld [vmem:[%s3 + $0x18] sm:$0xf]
    %v250 = vld [vmem:[%s3 + $0x1c] sm:$0xf]
    %v251 = vld [vmem:[%s3 + $0x20] sm:$0xf]
    %v252 = vld [vmem:[%s3 + $0x24] sm:$0xf]
    %v253 = vld [vmem:[%s3 + $0x28] sm:$0xf]
    %v254 = vld [vmem:[%s3 + $0x2c] sm:$0xf]
    %v257 = vrot.slane %v240, 1
    %v258 = vrot.slane %v240, 2
    %v259 = vrot.slane %v242, 1
    %v260 = vrot.slane %v242, 2
    %261 = vst [vmem:[#allocation1] ss:$9 sm:$0xff] %v240
    %s263 = scalar_lea.vmem [#allocation1], 1
    %264 = vst [vmem:[%s263] ss:$9 sm:$0xff] %v257
    %s266 = scalar_lea.vmem [#allocation1], 2
    %267 = vst [vmem:[%s266] ss:$9 sm:$0xff] %v258
    %s268 = scalar_lea.vmem [#allocation1], 3
    %269 = vst [vmem:[%s268] ss:$9 sm:$0xff] %v242
    %s271 = scalar_lea.vmem [#allocation1], 4
    %272 = vst [vmem:[%s271] ss:$9 sm:$0xff] %v259
    %s274 = scalar_lea.vmem [#allocation1], 5
    %275 = vst [vmem:[%s274] ss:$9 sm:$0xff] %v260
    %v276 = vld [vmem:[#allocation1] sm:$0xff]
    %v289 = vunpack.c.l.b16 %v243
    %v290 = vunpack.c.l.b16 %v244
    %v291 = vunpack.c.l.b16 %v245
    %v292 = vunpack.c.l.b16 %v246
    %v293 = vunpack.c.l.b16 %v247
    %v294 = vunpack.c.l.b16 %v248
    %v295 = vunpack.c.l.b16 %v249
    %v296 = vunpack.c.l.b16 %v250
    %v297 = vunpack.c.l.b16 %v251
    %v298 = vunpack.c.l.b16 %v252
    %v299 = vunpack.c.l.b16 %v253
    %v300 = vunpack.c.l.b16 %v254
    %v301 = vpack.c.b16 %v290, %v289
    %v302 = vpack.c.b16 %v292, %v291
    %v303 = vpack.c.b16 %v294, %v293
    %v304 = vpack.c.b16 %v296, %v295
    %v305 = vpack.c.b16 %v298, %v297
    %v306 = vpack.c.b16 %v300, %v299
    %vm313 = vcmask 785408
    %v314 = vsel %vm313, %v276, 0
    %316 = vmatpush.bf16.msra.mxu0 0
    %317 = vmatpush.bf16.msra.mxu0 0
    %318 = vmatpush.bf16.msra.mxu0 %v306
    %319 = vmatpush.bf16.msra.mxu0 %v305
    %320 = vmatpush.bf16.msra.mxu0 %v304
    %321 = vmatpush.bf16.msra.mxu0 %v303
    %322 = vmatpush.bf16.msra.mxu0 %v302
    %323 = vmatpush.bf16.msra.mxu0 %v301
    %324 = vmatmul.bf16.gmra.mxu0 %v314
    %v325 = vpop.f32.mrf.mxu0
    %v326 = vadd.f32 0.0, %v325
    %v327 = vpop.f32.mrf.mxu0
    %v328 = vadd.f32 0.0, %v327
    %329 = vdwg.mxu0
    %v332 = vrot.slane %v326, 2
    %v333 = vrot.slane %v326, 4
    %v334 = vrot.slane %v326, 6
    %v335 = vrot.slane %v328, 2
    %336 = vst [vmem:[#allocation1] ss:$4 sm:$0xff] %v326
    %s337 = scalar_lea.vmem [#allocation1], 1
    %338 = vst [vmem:[%s337] ss:$4 sm:$0xff] %v332
    %s339 = scalar_lea.vmem [#allocation1], 2
    %340 = vst [vmem:[%s339] ss:$4 sm:$0xff] %v333
    %v341 = vld.sshfl [vmem:[#allocation1] sm:$0xff pattern:$0x73625140]
    %s342 = scalar_lea.vmem [#allocation1], 32
    %343 = vst [vmem:[%s342] ss:$4 sm:$0xff] %v334
    %s344 = scalar_lea.vmem [#allocation1], 33
    %345 = vst [vmem:[%s344] ss:$4 sm:$0xff] %v328
    %s346 = scalar_lea.vmem [#allocation1], 34
    %347 = vst [vmem:[%s346] ss:$4 sm:$0xff] %v335
    %v348 = vld.sshfl [vmem:[#allocation1 + $0x20] sm:$0xff pattern:$0x73625140]
    %vm351 = vcmask 128000
    %v352 = vsel %vm351, %v341, -inf
    %v353 = vrot.slane %v352, 4
    %v354 = vmax.f32 %v352, %v353
    %v355 = vrot.slane %v354, 2
    %v356 = vmax.f32 %v354, %v355
    %v357 = vrot.slane %v356, 1
    %v358 = vmax.f32 %v356, %v357
    %v359 = vsel %vm351, %v348, -inf
    %v360 = vrot.slane %v359, 4
    %v361 = vmax.f32 %v359, %v360
    %v362 = vrot.slane %v361, 2
    %v363 = vmax.f32 %v361, %v362
    %v364 = vrot.slane %v363, 1
    %v365 = vmax.f32 %v363, %v364
    %v366 = vld [vmem:[%s4] sm:$0x1]
    %v368 = vperm.slane %v366, 0
    %v370 = vadd.f32 %v358, %v368
    %v371 = vadd.f32 %v365, %v368
    %v372 = vmax.f32 %v370, 0.0
    %v373 = vmax.f32 %v371, 0.0
    %v374 = vrot.slane %v49, 1
    %v375 = vrot.slane %v51, 2
    %v376 = vor.u32 %v374, %v375
    %v377 = vrot.slane %v56, 1
    %v378 = vrot.slane %v58, 2
    %v379 = vor.u32 %v377, %v378
    %380 = vrot.lane.b32.xlu0 %v376, 96
    %v381 = vpop.permute.xlu0 %380
    %382 = vrot.lane.b32.xlu0 %v379, 96
    %v383 = vpop.permute.xlu0 %382
    %v385 = vsel %vm313, %v240, %v381
    %v387 = vsel %vm313, %v242, %v383
    %v388 = vld [vmem:[%s5] sm:$0xf]
    %v389 = vld [vmem:[%s5 + $0x4] sm:$0xf]
    %v390 = vld [vmem:[%s5 + $0x8] sm:$0xf]
    %v391 = vld [vmem:[%s5 + $0xc] sm:$0xf]
    %v392 = vld [vmem:[%s5 + $0x10] sm:$0xf]
    %v393 = vld [vmem:[%s5 + $0x14] sm:$0xf]
    %v394 = vld [vmem:[%s5 + $0x18] sm:$0xf]
    %v395 = vld [vmem:[%s5 + $0x1c] sm:$0xf]
    %v396 = vld [vmem:[%s5 + $0x20] sm:$0xf]
    %v397 = vld [vmem:[%s5 + $0x24] sm:$0xf]
    %v398 = vld [vmem:[%s5 + $0x28] sm:$0xf]
    %v399 = vld [vmem:[%s5 + $0x2c] sm:$0xf]
    %v400 = vld [vmem:[%s5 + $0x30] sm:$0xf]
    %v401 = vld [vmem:[%s5 + $0x34] sm:$0xf]
    %v402 = vld [vmem:[%s5 + $0x38] sm:$0xf]
    %v403 = vld [vmem:[%s5 + $0x3c] sm:$0xf]
    %v406 = vrot.slane %v385, 1
    %v407 = vrot.slane %v385, 2
    %v408 = vrot.slane %v387, 1
    %v409 = vrot.slane %v387, 2
    %v410 = vunpack.i.l.s16 %v385
    %v411 = vunpack.i.h.s16 %v385
    %v412 = vunpack.i.l.s16 %v406
    %v413 = vunpack.i.h.s16 %v406
    %v414 = vunpack.i.l.s16 %v407
    %v415 = vunpack.i.l.s16 %v387
    %v416 = vunpack.i.h.s16 %v387
    %v417 = vunpack.i.l.s16 %v408
    %v418 = vunpack.i.h.s16 %v408
    %v419 = vunpack.i.l.s16 %v409
    %v420 = vpack.i.b16 %v411, %v410
    %v421 = vpack.i.b16 %v413, %v412
    %v422 = vpack.i.b16 %v415, %v414
    %v423 = vpack.i.b16 %v417, %v416
    %v424 = vpack.i.b16 %v419, %v418
    %426 = vst [vmem:[#allocation1] ss:$9 sm:$0xff] %v420
    %s428 = scalar_lea.vmem [#allocation1], 1
    %429 = vst [vmem:[%s428] ss:$9 sm:$0xff] %v421
    %s431 = scalar_lea.vmem [#allocation1], 2
    %432 = vst [vmem:[%s431] ss:$9 sm:$0xff] %v422
    %s434 = scalar_lea.vmem [#allocation1], 3
    %435 = vst [vmem:[%s434] ss:$9 sm:$0xff] %v423
    %s437 = scalar_lea.vmem [#allocation1], 4
    %438 = vst [vmem:[%s437] ss:$9 sm:$0xff] %v424
    %v439 = vld [vmem:[#allocation1] sm:$0xff]
    %v457 = vunpack.c.l.b16 %v388
    %v458 = vunpack.c.l.b16 %v389
    %v459 = vunpack.c.l.b16 %v390
    %v460 = vunpack.c.l.b16 %v391
    %v461 = vunpack.c.l.b16 %v392
    %v462 = vunpack.c.l.b16 %v393
    %v463 = vunpack.c.l.b16 %v394
    %v464 = vunpack.c.l.b16 %v395
    %v465 = vunpack.c.l.b16 %v396
    %v466 = vunpack.c.l.b16 %v397
    %v467 = vunpack.c.l.b16 %v398
    %v468 = vunpack.c.l.b16 %v399
    %v469 = vunpack.c.l.b16 %v400
    %v470 = vunpack.c.l.b16 %v401
    %v471 = vunpack.c.l.b16 %v402
    %v472 = vunpack.c.l.b16 %v403
    %v473 = vpack.c.b16 %v458, %v457
    %v474 = vpack.c.b16 %v460, %v459
    %v475 = vpack.c.b16 %v462, %v461
    %v476 = vpack.c.b16 %v464, %v463
    %v477 = vpack.c.b16 %v466, %v465
    %v478 = vpack.c.b16 %v468, %v467
    %v479 = vpack.c.b16 %v470, %v469
    %v480 = vpack.c.b16 %v472, %v471
    %489 = vmatpush.bf16.msra.mxu0 %v480
    %490 = vmatpush.bf16.msra.mxu0 %v479
    %491 = vmatpush.bf16.msra.mxu0 %v478
    %492 = vmatpush.bf16.msra.mxu0 %v477
    %493 = vmatpush.bf16.msra.mxu0 %v476
    %494 = vmatpush.bf16.msra.mxu0 %v475
    %495 = vmatpush.bf16.msra.mxu0 %v474
    %496 = vmatpush.bf16.msra.mxu0 %v473
    %497 = vmatmul.bf16.gmra.mxu0 %v439
    %v498 = vpop.f32.mrf.mxu0
    %v499 = vadd.f32 0.0, %v498
    %v500 = vpop.f32.mrf.mxu0
    %v501 = vadd.f32 0.0, %v500
    %502 = vdwg.mxu0
    %v505 = vrot.slane %v499, 1
    %v506 = vrot.slane %v499, 2
    %v507 = vrot.slane %v499, 3
    %v508 = vrot.slane %v499, 4
    %v509 = vrot.slane %v499, 5
    %v510 = vrot.slane %v499, 6
    %v511 = vrot.slane %v499, 7
    %v512 = vrot.slane %v501, 1
    %513 = vst [vmem:[#allocation1] ss:$9 sm:$0xff] %v499
    %s514 = scalar_lea.vmem [#allocation1], 1
    %515 = vst [vmem:[%s514] ss:$9 sm:$0xff] %v505
    %s516 = scalar_lea.vmem [#allocation1], 2
    %517 = vst [vmem:[%s516] ss:$9 sm:$0xff] %v506
    %s518 = scalar_lea.vmem [#allocation1], 3
    %519 = vst [vmem:[%s518] ss:$9 sm:$0xff] %v507
    %s520 = scalar_lea.vmem [#allocation1], 4
    %521 = vst [vmem:[%s520] ss:$9 sm:$0xff] %v508
    %v522 = vld [vmem:[#allocation1] sm:$0xff]
    %523 = vst [vmem:[#allocation1] ss:$9 sm:$0xff] %v509
    %524 = vst [vmem:[%s514] ss:$9 sm:$0xff] %v510
    %525 = vst [vmem:[%s516] ss:$9 sm:$0xff] %v511
    %526 = vst [vmem:[%s518] ss:$9 sm:$0xff] %v501
    %527 = vst [vmem:[%s520] ss:$9 sm:$0xff] %v512
    %v528 = vld [vmem:[#allocation1] sm:$0xff]
    %vm531 = vcmask 126976
    %v532 = vsel %vm531, %v522, -inf
    %v533 = vrot.slane %v532, 4
    %v534 = vmax.f32 %v532, %v533
    %v535 = vrot.slane %v534, 2
    %v536 = vmax.f32 %v534, %v535
    %v537 = vrot.slane %v536, 1
    %v538 = vmax.f32 %v536, %v537
    %v539 = vsel %vm531, %v528, -inf
    %v540 = vrot.slane %v539, 4
    %v541 = vmax.f32 %v539, %v540
    %v542 = vrot.slane %v541, 2
    %v543 = vmax.f32 %v541, %v542
    %v544 = vrot.slane %v543, 1
    %v545 = vmax.f32 %v543, %v544
    %v546 = vld [vmem:[%s6] sm:$0x1]
    %v548 = vperm.slane %v546, 0
    %v550 = vadd.f32 %v538, %v548
    %v551 = vadd.f32 %v545, %v548
    %v552 = vmax.f32 %v550, 0.0
    %v553 = vmax.f32 %v551, 0.0
    %v554 = vrot.slane %v46, 2
    %v555 = vrot.slane %v47, 2
    %v556 = vld [vmem:[%s7] sm:$0xf]
    %v557 = vld [vmem:[%s7 + $0x4] sm:$0xf]
    %v558 = vld [vmem:[%s7 + $0x8] sm:$0xf]
    %v559 = vld [vmem:[%s7 + $0xc] sm:$0xf]
    %v560 = vld [vmem:[%s7 + $0x10] sm:$0xf]
    %v561 = vld [vmem:[%s7 + $0x14] sm:$0xf]
    %v562 = vld [vmem:[%s7 + $0x18] sm:$0xf]
    %v563 = vld [vmem:[%s7 + $0x1c] sm:$0xf]
    %v564 = vld [vmem:[%s7 + $0x20] sm:$0xf]
    %v565 = vld [vmem:[%s7 + $0x24] sm:$0xf]
    %v566 = vld [vmem:[%s7 + $0x28] sm:$0xf]
    %v567 = vld [vmem:[%s7 + $0x2c] sm:$0xf]
    %v568 = vld [vmem:[%s7 + $0x30] sm:$0xf]
    %v569 = vld [vmem:[%s7 + $0x34] sm:$0xf]
    %v570 = vld [vmem:[%s7 + $0x38] sm:$0xf]
    %v571 = vld [vmem:[%s7 + $0x3c] sm:$0xf]
    %v572 = vld [vmem:[%s7 + $0x40] sm:$0xf]
    %v573 = vld [vmem:[%s7 + $0x44] sm:$0xf]
    %v574 = vld [vmem:[%s7 + $0x48] sm:$0xf]
    %v575 = vld [vmem:[%s7 + $0x4c] sm:$0xf]
    %v576 = vrot.slane %v554, 6
    %v577 = vrot.slane %v555, 6
    %vm578 = vcmask 1041408
    %v580 = vsel %vm578, %v385, %v576
    %v582 = vsel %vm578, %v387, %v577
    %583 = vst [vmem:[#allocation1] ss:$4 sm:$0xff] %v580
    %s584 = scalar_lea.vmem [#allocation1], 1
    %585 = vst [vmem:[%s584] ss:$4 sm:$0xff] %v582
    %v586 = vld.sshfl [vmem:[#allocation1] sm:$0xff pattern:$0x73625140]
    %v587 = vld.sshfl [vmem:[#allocation1 + $0x8] sm:$0xff pattern:$0x73625140]
    %v609 = vunpack.c.l.b16 %v556
    %v610 = vunpack.c.l.b16 %v557
    %v611 = vunpack.c.l.b16 %v558
    %v612 = vunpack.c.l.b16 %v559
    %v613 = vunpack.c.l.b16 %v560
    %v614 = vunpack.c.l.b16 %v561
    %v615 = vunpack.c.l.b16 %v562
    %v616 = vunpack.c.l.b16 %v563
    %v617 = vunpack.c.l.b16 %v564
    %v618 = vunpack.c.l.b16 %v565
    %v619 = vunpack.c.l.b16 %v566
    %v620 = vunpack.c.l.b16 %v567
    %v621 = vunpack.c.l.b16 %v568
    %v622 = vunpack.c.l.b16 %v569
    %v623 = vunpack.c.l.b16 %v570
    %v624 = vunpack.c.l.b16 %v571
    %v625 = vunpack.c.l.b16 %v572
    %v626 = vunpack.c.l.b16 %v573
    %v627 = vunpack.c.l.b16 %v574
    %v628 = vunpack.c.l.b16 %v575
    %v629 = vpack.c.b16 %v610, %v609
    %v630 = vpack.c.b16 %v612, %v611
    %v631 = vpack.c.b16 %v614, %v613
    %v632 = vpack.c.b16 %v616, %v615
    %v633 = vpack.c.b16 %v618, %v617
    %v634 = vpack.c.b16 %v620, %v619
    %v635 = vpack.c.b16 %v622, %v621
    %v636 = vpack.c.b16 %v624, %v623
    %v637 = vpack.c.b16 %v626, %v625
    %v638 = vpack.c.b16 %v628, %v627
    %v649 = vsel %vm66, %v587, 0
    %651 = vmatpush.bf16.msra.mxu0 %v636
    %652 = vmatpush.bf16.msra.mxu0 %v635
    %653 = vmatpush.bf16.msra.mxu0 %v634
    %654 = vmatpush.bf16.msra.mxu0 %v633
    %655 = vmatpush.bf16.msra.mxu0 %v632
    %656 = vmatpush.bf16.msra.mxu0 %v631
    %657 = vmatpush.bf16.msra.mxu0 %v630
    %658 = vmatpush.bf16.msra.mxu0 %v629
    %659 = vmatmul.bf16.gmra.mxu0 %v586
    %v660 = vpop.f32.mrf.mxu0
    %v661 = vadd.f32 0.0, %v660
    %v662 = vpop.f32.mrf.mxu0
    %663 = vdwg.mxu0
    %664 = vmatpush.bf16.msra.mxu0 0
    %665 = vmatpush.bf16.msra.mxu0 0
    %666 = vmatpush.bf16.msra.mxu0 0
    %667 = vmatpush.bf16.msra.mxu0 0
    %668 = vmatpush.bf16.msra.mxu0 0
    %669 = vmatpush.bf16.msra.mxu0 0
    %670 = vmatpush.bf16.msra.mxu0 %v638
    %671 = vmatpush.bf16.msra.mxu0 %v637
    %672 = vmatmul.bf16.gmra.mxu0 %v649
    %v673 = vpop.f32.mrf.mxu0
    %v674 = vadd.f32 %v661, %v673
    %v675 = vpop.f32.mrf.mxu0
    %676 = vdwg.mxu0
    %v678 = vrot.slane %v674, 4
    %vm680 = vcmask 125952
    %v681 = vsel %vm680, %v674, -inf
    %v682 = vrot.slane %v681, 4
    %v683 = vmax.f32 %v681, %v682
    %v684 = vrot.slane %v683, 2
    %v685 = vmax.f32 %v683, %v684
    %v686 = vrot.slane %v685, 1
    %v687 = vmax.f32 %v685, %v686
    %v688 = vsel %vm680, %v678, -inf
    %v689 = vrot.slane %v688, 4
    %v690 = vmax.f32 %v688, %v689
    %v691 = vrot.slane %v690, 2
    %v692 = vmax.f32 %v690, %v691
    %v693 = vrot.slane %v692, 1
    %v694 = vmax.f32 %v692, %v693
    %v695 = vld [vmem:[%s8] sm:$0x1]
    %v697 = vperm.slane %v695, 0
    %v699 = vadd.f32 %v687, %v697
    %v700 = vadd.f32 %v694, %v697
    %v701 = vmax.f32 %v699, 0.0
    %v702 = vmax.f32 %v700, 0.0
    %v705 = vrot.slane %v232, 7
    %vm706 = vcmask 1041409
    %v707 = vsel %vm706, %v705, %v231
    %v711 = vrot.slane %v373, 7
    %v712 = vsel %vm706, %v711, %v372
    %713 = vrot.lane.b32.xlu0 %v712, 16
    %v714 = vpop.permute.xlu0 %713
    %v718 = vrot.slane %v553, 7
    %v719 = vsel %vm706, %v718, %v552
    %720 = vrot.lane.b32.xlu0 %v719, 32
    %v721 = vpop.permute.xlu0 %720
    %v725 = vrot.slane %v702, 7
    %v726 = vsel %vm706, %v725, %v701
    %727 = vrot.lane.b32.xlu0 %v726, 48
    %v728 = vpop.permute.xlu0 %727
    %vm730 = vcmask 130048
    %v731 = vsel %vm730, %v707, %v714
    %v732 = vsel %vm66, %v731, %v721
    %vm733 = vcmask 392192
    %v734 = vsel %vm733, %v732, %v728
    %v735 = vpack.c.bf16 %v734, %v734
    %v736 = vld [vmem:[%s9] sm:$0xf]
    %v737 = vld [vmem:[%s9 + $0x4] sm:$0xf]
    %v738 = vld [vmem:[%s9 + $0x8] sm:$0xf]
    %v739 = vld [vmem:[%s9 + $0xc] sm:$0xf]
    %v740 = vld [vmem:[%s9 + $0x10] sm:$0xf]
    %v741 = vld [vmem:[%s9 + $0x14] sm:$0xf]
    %v742 = vld [vmem:[%s9 + $0x18] sm:$0xf]
    %v743 = vld [vmem:[%s9 + $0x1c] sm:$0xf]
    %v744 = vld [vmem:[%s10] sm:$0x1]
    %v746 = vperm.slane %v744, 0
    %v756 = vunpack.c.l.b16 %v736
    %v757 = vunpack.c.l.b16 %v737
    %v758 = vunpack.c.l.b16 %v738
    %v759 = vunpack.c.l.b16 %v739
    %v760 = vunpack.c.l.b16 %v740
    %v761 = vunpack.c.l.b16 %v741
    %v762 = vunpack.c.l.b16 %v742
    %v763 = vunpack.c.l.b16 %v743
    %v764 = vpack.c.b16 %v757, %v756
    %v765 = vpack.c.b16 %v759, %v758
    %v766 = vpack.c.b16 %v761, %v760
    %v767 = vpack.c.b16 %v763, %v762
    %v773 = vsel %vm155, %v735, 0
    %775 = vmatpush.bf16.msra.mxu0 0
    %776 = vmatpush.bf16.msra.mxu0 0
    %777 = vmatpush.bf16.msra.mxu0 0
    %778 = vmatpush.bf16.msra.mxu0 0
    %779 = vmatpush.bf16.msra.mxu0 %v767
    %780 = vmatpush.bf16.msra.mxu0 %v766
    %781 = vmatpush.bf16.msra.mxu0 %v765
    %782 = vmatpush.bf16.msra.mxu0 %v764
    %783 = vmatmul.bf16.gmra.mxu0 %v773
    %v784 = vpop.f32.mrf.mxu0
    %v785 = vadd.f32 %v746, %v784
    %v786 = vpop.f32.mrf.mxu0
    %787 = vdwg.mxu0
    %vm788 = vcmask 189440
    %789 = vst.msk [vmem:[#allocation2] sm:$0x3] %vm788, %v785
    // Predicated region
    $region46: #{tpu_custom_call.1} parent=1 // pred_check
      _
    $region47: #{tpu_custom_call.1} parent=1 // pred_check_branch
      %791 = sbr.rel (0) target = $region49
    $region48: #{tpu_custom_call.1} parent=1 // pred_region
      %793 = vsyncadd [#allocation3], 0
      %s795 = sshll.u32 [#allocation2], 4
      %s796 = int_to_ptr.vmem [resolvable:$true] %s795
      %s797 = sshll.u32 %s11, 4
      %s798 = int_to_ptr.hbm [resolvable:$true] %s797
      %800 = dma.vmem_to_hbm [thread:$0]  %s796, 32, %s798, [#allocation3]
    $region49: #{tpu_custom_call.1} parent=1 // pred_fallthru
      _
    // Predicated region
    $region50: #{tpu_custom_call.1} parent=1 // pred_check
      _
    $region51: #{tpu_custom_call.1} parent=1 // pred_check_branch
      %802 = sbr.rel (0) target = $region53
    $region52: #{tpu_custom_call.1} parent=1 // pred_region
      %804 = dma.done [#allocation3], 32
    $region53: #{tpu_custom_call.1} parent=1 // pred_fallthru
      _
    %805 = vsyncpa [#allocation3], 1

</llo_original>
